<compile_context>
chip_gen: v7x
topology: tpu7x:2x2x1
jax: 0.10.0
libtpu: 0.0.40
codegen_flags: <defaults>
</compile_context>

<pallas_src>
import functools

import numpy as np
import jax
import jax.numpy as jnp
from jax.experimental import pallas as pl
from jax.experimental.pallas import tpu as pltpu


# ----------------------------- Pallas kernel --------------------------------
def _cnn_kernel(x_ref, w1_ref, b1_ref, w2_ref, b2_ref, fcw_ref, fcb_ref,
                o_ref, h1_ref, h2_ref, *, L, K):
    """Processes one batch tile of TB samples per grid step, fully batched.

    x_ref  : (TB*L, C)       input tile; sample s owns rows [s*L, (s+1)*L)
    w1_ref : (K*C, 32)        conv1 weight, taps folded into the contraction dim
    b1_ref : (1, 32)
    w2_ref : (K*32, 64)       conv2 weight, taps folded
    b2_ref : (1, 64)
    fcw_ref: (P2*64, 128)     fc1 weight, rows ordered (t, c) to match the flatten
    fcb_ref: (1, 128)
    o_ref  : (TB, 128)        output tile (lane-dense, 128 wide)
    h1_ref : (>=TB*L, 32)     VMEM scratch: conv1+relu, reread with stride 2
    h2_ref : (>=TB*L//2, 64)  VMEM scratch: conv2+relu, reread with stride L//2
    """
    NL, C = x_ref.shape
    TB = NL // L
    Lq = L // 2                   # rows per sample after pool1 (incl. tail pad)
    L1 = L - (K - 1)              # conv1 'valid' output length per sample
    P1 = L1 // 2                  # pool1 output length per sample
    L2 = P1 - (K - 1)             # conv2 'valid' output length per sample
    P2 = L2 // 2                  # pool2 output length per sample

    # Grid-invariant operands: load once per grid step.
    w1 = w1_ref[...]
    b1 = b1_ref[...]
    w2 = w2_ref[...]
    b2 = b2_ref[...]
    fcw = fcw_ref[...]
    fcb = fcb_ref[...]

    # ---- conv1 + relu, batched: ONE matmul for the whole tile --------------
    # im2col row r = s*L + t holds taps x[r], x[r+1], ..., x[r+K-1]; rows with
    # t >= L1 mix samples (garbage) but only land in per-sample tail rows that
    # the pools never read.
    x = x_ref[...]                                                # (TB*L, C)
    N1 = NL - (K - 1)
    xcat1 = jnp.concatenate([x[j:j + N1, :] for j in range(K)], axis=1)
    h1_ref[pl.ds(0, N1), :] = jnp.maximum(
        jnp.dot(xcat1, w1, preferred_element_type=jnp.float32) + b1, 0.0)

    # ---- maxpool1d(2): stride-2 reread of the scratch (L is even, so global
    # even/odd rows are exactly per-sample even/odd rows) ---------------------
    NQ = TB * Lq
    p1 = jnp.maximum(h1_ref[pl.ds(0, NQ, 2), :],
                     h1_ref[pl.ds(1, NQ, 2), :])                  # (TB*Lq, 32)

    # ---- conv2 + relu, batched, taps folded: ONE matmul ---------------------
    N2 = NQ - (K - 1)
    xcat2 = jnp.concatenate([p1[j:j + N2, :] for j in range(K)], axis=1)
    h2_ref[pl.ds(0, N2), :] = jnp.maximum(
        jnp.dot(xcat2, w2, preferred_element_type=jnp.float32) + b2, 0.0)

    # ---- maxpool1d(2) + flatten, fused: for each of the P2 kept time-steps,
    # gather the even/odd conv2 row of every sample with one stride-Lq read,
    # max them, then lane-concat the P2 (TB, 64) pieces -> (TB, P2*64) ---------
    flat = jnp.concatenate(
        [jnp.maximum(h2_ref[pl.ds(2 * t, TB, Lq), :],
                     h2_ref[pl.ds(2 * t + 1, TB, Lq), :]) for t in range(P2)],
        axis=1)                                                   # (TB, P2*64)

    # ---- fc1 + relu: one (TB, P2*64) @ (P2*64, 128) matmul for the tile -----
    o_ref[...] = jnp.maximum(
        jnp.dot(flat, fcw, preferred_element_type=jnp.float32) + fcb, 0.0)


# --------------------------- one-time weight prep -----------------------------
def prepare_params(params):
    """One-time re-layout of PyTorch-layout params into kernel layout.

    Hoisted out of the forward so steady-state calls pay no XLA transposes.
    """
    w1, b1, w2, b2, fcw, fcb = params
    o1, c_in, k = w1.shape                  # (32, C, K)
    o2 = w2.shape[0]                        # 64
    n_out, f_in = fcw.shape                 # (128, 64*P2)
    p2 = f_in // o2

    w1k = jnp.transpose(w1, (2, 1, 0)).reshape(k * c_in, o1)          # (K*C, 32)
    w2k = jnp.transpose(w2, (2, 1, 0)).reshape(k * w2.shape[1], o2)   # (K*32, 64)
    # torch flatten order of (B, 64, P2) is f = c*P2 + t  ->  rows ordered (t, c)
    fcwk = jnp.transpose(fcw.reshape(n_out, o2, p2), (2, 1, 0)).reshape(p2 * o2, n_out)
    return (w1k, b1.reshape(1, o1), w2k, b2.reshape(1, o2),
            fcwk, fcb.reshape(1, n_out))


def _pick_block_b(batch):
    """Batch-tile size.  Small batches: one grid step (no per-step overhead on
    single-TC v5e/v6e, and a tiny batch can't feed two v7x cores anyway).
    Larger batches: >=2 grid steps (v7x megacore) with multiple-of-8 tiles so
    every block stays (8,128)-tileable and each conv matmul has M = block_b*L
    in the hundreds."""
    if batch <= 16:
        return max(1, batch)
    bb = min(32, -(-batch // 2))
    return -(-bb // 8) * 8


# ------------------------------- wrapper -------------------------------------
@functools.partial(jax.jit, static_argnames=("block_b",))
def cnn_forward(x, w1k, b1k, w2k, b2k, fcwk, fcbk, *, block_b=1):
    """x: (B, L, C) float32; weights already in kernel layout (prepare_params)."""
    B, L, C = x.shape
    K = w1k.shape[0] // C
    O1 = w1k.shape[1]
    O2 = w2k.shape[1]
    NOUT = fcwk.shape[1]
    L1 = L - (K - 1)
    P1 = L1 // 2
    L2 = P1 - (K - 1)
    P2 = L2 // 2
    assert L % 2 == 0, "kernel assumes even L (global-parity pooling trick)"
    assert P2 >= 1, "sequence too short for two conv+pool stages"
    assert fcwk.shape[0] == P2 * O2, "fc1 in_features must match flatten size"

    nb = pl.cdiv(B, block_b)
    if nb > 1:
        assert block_b % 8 == 0, "block_b must be a multiple of 8 when grid > 1"
    Bp = nb * block_b
    if Bp != B:
        x = jnp.pad(x, ((0, Bp - B), (0, 0), (0, 0)))
    x2 = x.reshape(Bp * L, C)               # free reshape: merges leading dims

    Lq = L // 2
    h1_rows = -(-(block_b * L) // 8) * 8    # sublane extents padded to 8
    h2_rows = -(-(block_b * Lq) // 8) * 8

    out = pl.pallas_call(
        functools.partial(_cnn_kernel, L=L, K=K),
        out_shape=jax.ShapeDtypeStruct((Bp, NOUT), jnp.float32),
        grid=(nb,),
        in_specs=[
            pl.BlockSpec((block_b * L, C), lambda g: (g, 0)),
            pl.BlockSpec((K * C, O1), lambda g: (0, 0)),
            pl.BlockSpec((1, O1), lambda g: (0, 0)),
            pl.BlockSpec((K * O1, O2), lambda g: (0, 0)),
            pl.BlockSpec((1, O2), lambda g: (0, 0)),
            pl.BlockSpec((P2 * O2, NOUT), lambda g: (0, 0)),
            pl.BlockSpec((1, NOUT), lambda g: (0, 0)),
        ],
        out_specs=pl.BlockSpec((block_b, NOUT), lambda g: (g, 0)),
        scratch_shapes=[
            pltpu.VMEM((h1_rows, O1), jnp.float32),
            pltpu.VMEM((h2_rows, O2), jnp.float32),
        ],
        compiler_params=pltpu.CompilerParams(
            dimension_semantics=("parallel",)),
    )(x2, w1k, b1k, w2k, b2k, fcwk, fcbk)
    return out[:B]                                                # (B, 128)


# --------------------------- pure-JAX reference -------------------------------
def reference(x, params):
    w1, b1, w2, b2, fcw, fcb = params
    dn = ('NCH', 'OIH', 'NCH')
    y = jnp.transpose(x, (0, 2, 1))                       # (B, C, L), like torch
    y = jax.lax.conv_general_dilated(y, w1, (1,), 'VALID', dimension_numbers=dn)
    y = jax.nn.relu(y + b1[None, :, None])
    y = y[:, :, :(y.shape[2] // 2) * 2].reshape(y.shape[0], y.shape[1], -1, 2).max(-1)
    y = jax.lax.conv_general_dilated(y, w2, (1,), 'VALID', dimension_numbers=dn)
    y = jax.nn.relu(y + b2[None, :, None])
    y = y[:, :, :(y.shape[2] // 2) * 2].reshape(y.shape[0], y.shape[1], -1, 2).max(-1)
    flat = y.reshape(y.shape[0], -1)
    return jax.nn.relu(flat @ fcw.T + fcb[None, :])


# --------------------------------- main ---------------------------------------
if __name__ == "__main__":
    B, L, C = 2, 16, 4          # small shapes: batch=2, seq=16, input_channels=4
    K = 3
    L1 = L - (K - 1); P1 = L1 // 2; L2 = P1 - (K - 1); P2 = L2 // 2
    F = 64 * P2                 # actual flatten size the forward produces
    # TODO(synk): the original module sizes fc1 as Linear(64 * _get_conv_output_size(...), 128)
    # with a hard-coded dummy length of 100, which is inconsistent with forward()'s flatten;
    # here fc1.in_features is sized to the real flatten (64 * P2) so the forward is runnable.

    key = jax.random.PRNGKey(0)
    k1, k2, k3, k4, k5, k6, kx = jax.random.split(key, 7)

    def u(k, shape, fan_in):
        bound = 1.0 / np.sqrt(fan_in)
        return jax.random.uniform(k, shape, jnp.float32, -bound, bound)

    w1 = u(k1, (32, C, K), C * K)          # Conv1d(C, 32, 3) weight (torch layout)
    b1 = u(k2, (32,), C * K)
    w2 = u(k3, (64, 32, K), 32 * K)        # Conv1d(32, 64, 3) weight
    b2 = u(k4, (64,), 32 * K)
    fcw = u(k5, (128, F), F)               # Linear(F, 128) weight
    fcb = u(k6, (128,), F)
    params = (w1, b1, w2, b2, fcw, fcb)

    # one-time weight re-layout (hoisted out of the steady-state forward path)
    kparams = jax.block_until_ready(prepare_params(params))

    x = jax.random.normal(kx, (B, L, C), jnp.float32)

    out = jax.block_until_ready(
        cnn_forward(x, *kparams, block_b=_pick_block_b(B)))
    ref = jax.block_until_ready(reference(x, params))

    assert out.shape == (B, 128), out.shape
    assert np.allclose(np.asarray(out), np.asarray(ref), rtol=1e-4, atol=1e-4), \
        float(np.max(np.abs(np.asarray(out) - np.asarray(ref))))
    print("KERNEL_OK")
</pallas_src>

<mosaic_0001>
module attributes {stable_mosaic.version = 11 : i64} {
  func.func @_cnn_kernel(%arg0: i32, %arg1: memref<32x4xf32, #tpu.memory_space<vmem>>, %arg2: memref<12x32xf32, #tpu.memory_space<vmem>>, %arg3: memref<1x32xf32, #tpu.memory_space<vmem>>, %arg4: memref<96x64xf32, #tpu.memory_space<vmem>>, %arg5: memref<1x64xf32, #tpu.memory_space<vmem>>, %arg6: memref<128x128xf32, #tpu.memory_space<vmem>>, %arg7: memref<1x128xf32, #tpu.memory_space<vmem>>, %arg8: memref<2x128xf32, #tpu.memory_space<vmem>>, %arg9: memref<32x32xf32, #tpu.memory_space<vmem>>, %arg10: memref<16x64xf32, #tpu.memory_space<vmem>>) attributes {dimension_semantics = [#tpu.dimension_semantics<parallel>], iteration_bounds = array<i64: 1>, scalar_prefetch = 0 : i64, scratch_operands = 2 : i64, tpu.core_type = #tpu.core_type<tc>, window_params = [{transform_indices = @transform_0, window_bounds = array<i64: 32, 4>}, {pipeline_mode = #tpu.pipeline_mode<synchronous>, transform_indices = @transform_1, window_bounds = array<i64: 12, 32>}, {pipeline_mode = #tpu.pipeline_mode<synchronous>, transform_indices = @transform_2, window_bounds = array<i64: 1, 32>}, {pipeline_mode = #tpu.pipeline_mode<synchronous>, transform_indices = @transform_3, window_bounds = array<i64: 96, 64>}, {pipeline_mode = #tpu.pipeline_mode<synchronous>, transform_indices = @transform_4, window_bounds = array<i64: 1, 64>}, {pipeline_mode = #tpu.pipeline_mode<synchronous>, transform_indices = @transform_5, window_bounds = array<i64: 128, 128>}, {pipeline_mode = #tpu.pipeline_mode<synchronous>, transform_indices = @transform_6, window_bounds = array<i64: 1, 128>}, {transform_indices = @transform_7, window_bounds = array<i64: 2, 128>}]} {
    %c0 = arith.constant 0 : index
    %c0_0 = arith.constant 0 : index
    %0 = vector.load %arg2[%c0, %c0_0] : memref<12x32xf32, #tpu.memory_space<vmem>>, vector<12x32xf32>
    %c0_1 = arith.constant 0 : index
    %c0_2 = arith.constant 0 : index
    %1 = vector.load %arg3[%c0_1, %c0_2] : memref<1x32xf32, #tpu.memory_space<vmem>>, vector<1x32xf32>
    %c0_3 = arith.constant 0 : index
    %c0_4 = arith.constant 0 : index
    %2 = vector.load %arg4[%c0_3, %c0_4] : memref<96x64xf32, #tpu.memory_space<vmem>>, vector<96x64xf32>
    %c0_5 = arith.constant 0 : index
    %c0_6 = arith.constant 0 : index
    %3 = vector.load %arg5[%c0_5, %c0_6] : memref<1x64xf32, #tpu.memory_space<vmem>>, vector<1x64xf32>
    %c0_7 = arith.constant 0 : index
    %c0_8 = arith.constant 0 : index
    %4 = vector.load %arg6[%c0_7, %c0_8] : memref<128x128xf32, #tpu.memory_space<vmem>>, vector<128x128xf32>
    %c0_9 = arith.constant 0 : index
    %c0_10 = arith.constant 0 : index
    %5 = vector.load %arg7[%c0_9, %c0_10] : memref<1x128xf32, #tpu.memory_space<vmem>>, vector<1x128xf32>
    %c0_11 = arith.constant 0 : index
    %c0_12 = arith.constant 0 : index
    %6 = vector.load %arg1[%c0_11, %c0_12] : memref<32x4xf32, #tpu.memory_space<vmem>>, vector<32x4xf32>
    %7 = vector.extract_strided_slice %6 {offsets = [0, 0], sizes = [30, 4], strides = [1, 1]} : vector<32x4xf32> to vector<30x4xf32>
    %8 = vector.extract_strided_slice %6 {offsets = [1, 0], sizes = [30, 4], strides = [1, 1]} : vector<32x4xf32> to vector<30x4xf32>
    %9 = vector.extract_strided_slice %6 {offsets = [2, 0], sizes = [30, 4], strides = [1, 1]} : vector<32x4xf32> to vector<30x4xf32>
    %10 = tpu.concatenate %7, %8, %9 in 1 : vector<30x4xf32>, vector<30x4xf32>, vector<30x4xf32> -> vector<30x12xf32>
    %cst = arith.constant dense<0.000000e+00> : vector<30x32xf32>
    %11 = tpu.matmul %10, %0, %cst {dimension_numbers = #tpu.dot_dimension_numbers<[1], [0], [0], [1], [0, 0, 1, 1], [], []>} : vector<30x12xf32>, vector<12x32xf32>, vector<30x32xf32> -> vector<30x32xf32>
    %12 = vector.broadcast %1 : vector<1x32xf32> to vector<30x32xf32>
    %13 = arith.addf %11, %12 : vector<30x32xf32>
    %cst_13 = arith.constant 0.000000e+00 : f32
    %14 = vector.broadcast %cst_13 : f32 to vector<30x32xf32>
    %15 = arith.maximumf %13, %14 : vector<30x32xf32>
    %c0_14 = arith.constant 0 : index
    %c0_15 = arith.constant 0 : index
    %16 = vector.load %arg9[%c0_14, %c0_15] : memref<32x32xf32, #tpu.memory_space<vmem>>, vector<30x32xf32>
    tpu.vector_store %arg9[%c0_14, %c0_15], %15 {strides = array<i32>} : memref<32x32xf32, #tpu.memory_space<vmem>>, vector<30x32xf32>,
    %c0_16 = arith.constant 0 : index
    %c0_17 = arith.constant 0 : index
    %17 = tpu.strided_load %arg9[%c0_16, %c0_17] {strides = array<i32: 2, 1>} : memref<32x32xf32, #tpu.memory_space<vmem>>, vector<16x32xf32>
    %c1 = arith.constant 1 : index
    %c0_18 = arith.constant 0 : index
    %18 = tpu.strided_load %arg9[%c1, %c0_18] {strides = array<i32: 2, 1>} : memref<32x32xf32, #tpu.memory_space<vmem>>, vector<16x32xf32>
    %19 = arith.maximumf %17, %18 : vector<16x32xf32>
    %20 = vector.extract_strided_slice %19 {offsets = [0, 0], sizes = [14, 32], strides = [1, 1]} : vector<16x32xf32> to vector<14x32xf32>
    %21 = vector.extract_strided_slice %19 {offsets = [1, 0], sizes = [14, 32], strides = [1, 1]} : vector<16x32xf32> to vector<14x32xf32>
    %22 = vector.extract_strided_slice %19 {offsets = [2, 0], sizes = [14, 32], strides = [1, 1]} : vector<16x32xf32> to vector<14x32xf32>
    %23 = tpu.concatenate %20, %21, %22 in 1 : vector<14x32xf32>, vector<14x32xf32>, vector<14x32xf32> -> vector<14x96xf32>
    %cst_19 = arith.constant dense<0.000000e+00> : vector<14x64xf32>
    %24 = tpu.matmul %23, %2, %cst_19 {dimension_numbers = #tpu.dot_dimension_numbers<[1], [0], [0], [1], [0, 0, 1, 1], [], []>} : vector<14x96xf32>, vector<96x64xf32>, vector<14x64xf32> -> vector<14x64xf32>
    %25 = vector.broadcast %3 : vector<1x64xf32> to vector<14x64xf32>
    %26 = arith.addf %24, %25 : vector<14x64xf32>
    %cst_20 = arith.constant 0.000000e+00 : f32
    %27 = vector.broadcast %cst_20 : f32 to vector<14x64xf32>
    %28 = arith.maximumf %26, %27 : vector<14x64xf32>
    %c0_21 = arith.constant 0 : index
    %c0_22 = arith.constant 0 : index
    %29 = vector.load %arg10[%c0_21, %c0_22] : memref<16x64xf32, #tpu.memory_space<vmem>>, vector<14x64xf32>
    tpu.vector_store %arg10[%c0_21, %c0_22], %28 {strides = array<i32>} : memref<16x64xf32, #tpu.memory_space<vmem>>, vector<14x64xf32>,
    %c0_23 = arith.constant 0 : index
    %c0_24 = arith.constant 0 : index
    %30 = tpu.strided_load %arg10[%c0_23, %c0_24] {strides = array<i32: 8, 1>} : memref<16x64xf32, #tpu.memory_space<vmem>>, vector<2x64xf32>
    %c1_25 = arith.constant 1 : index
    %c0_26 = arith.constant 0 : index
    %31 = tpu.strided_load %arg10[%c1_25, %c0_26] {strides = array<i32: 8, 1>} : memref<16x64xf32, #tpu.memory_space<vmem>>, vector<2x64xf32>
    %32 = arith.maximumf %30, %31 : vector<2x64xf32>
    %c2 = arith.constant 2 : index
    %c0_27 = arith.constant 0 : index
    %33 = tpu.strided_load %arg10[%c2, %c0_27] {strides = array<i32: 8, 1>} : memref<16x64xf32, #tpu.memory_space<vmem>>, vector<2x64xf32>
    %c3 = arith.constant 3 : index
    %c0_28 = arith.constant 0 : index
    %34 = tpu.strided_load %arg10[%c3, %c0_28] {strides = array<i32: 8, 1>} : memref<16x64xf32, #tpu.memory_space<vmem>>, vector<2x64xf32>
    %35 = arith.maximumf %33, %34 : vector<2x64xf32>
    %36 = tpu.concatenate %32, %35 in 1 : vector<2x64xf32>, vector<2x64xf32> -> vector<2x128xf32>
    %cst_29 = arith.constant dense<0.000000e+00> : vector<2x128xf32>
    %37 = tpu.matmul %36, %4, %cst_29 {dimension_numbers = #tpu.dot_dimension_numbers<[1], [0], [0], [1], [0, 0, 1, 1], [], []>} : vector<2x128xf32>, vector<128x128xf32>, vector<2x128xf32> -> vector<2x128xf32>
    %38 = vector.broadcast %5 : vector<1x128xf32> to vector<2x128xf32>
    %39 = arith.addf %37, %38 : vector<2x128xf32>
    %cst_30 = arith.constant 0.000000e+00 : f32
    %40 = vector.broadcast %cst_30 : f32 to vector<2x128xf32>
    %41 = arith.maximumf %39, %40 : vector<2x128xf32>
    %c0_31 = arith.constant 0 : index
    %c0_32 = arith.constant 0 : index
    %42 = vector.load %arg8[%c0_31, %c0_32] : memref<2x128xf32, #tpu.memory_space<vmem>>, vector<2x128xf32>
    tpu.vector_store %arg8[%c0_31, %c0_32], %41 {strides = array<i32>} : memref<2x128xf32, #tpu.memory_space<vmem>>, vector<2x128xf32>,
    return
  }
  func.func @transform_0(%arg0: i32) -> (i32, i32) {
    %c0_i32 = arith.constant 0 : i32
    %c0_i32_0 = arith.constant 0 : i32
    return %arg0, %c0_i32 : i32, i32
  }
  func.func @transform_1(%arg0: i32) -> (i32, i32) {
    %c0_i32 = arith.constant 0 : i32
    %c0_i32_0 = arith.constant 0 : i32
    %c0_i32_1 = arith.constant 0 : i32
    return %c0_i32, %c0_i32_0 : i32, i32
  }
  func.func @transform_2(%arg0: i32) -> (i32, i32) {
    %c0_i32 = arith.constant 0 : i32
    %c0_i32_0 = arith.constant 0 : i32
    %c0_i32_1 = arith.constant 0 : i32
    return %c0_i32, %c0_i32_0 : i32, i32
  }
  func.func @transform_3(%arg0: i32) -> (i32, i32) {
    %c0_i32 = arith.constant 0 : i32
    %c0_i32_0 = arith.constant 0 : i32
    %c0_i32_1 = arith.constant 0 : i32
    return %c0_i32, %c0_i32_0 : i32, i32
  }
  func.func @transform_4(%arg0: i32) -> (i32, i32) {
    %c0_i32 = arith.constant 0 : i32
    %c0_i32_0 = arith.constant 0 : i32
    %c0_i32_1 = arith.constant 0 : i32
    return %c0_i32, %c0_i32_0 : i32, i32
  }
  func.func @transform_5(%arg0: i32) -> (i32, i32) {
    %c0_i32 = arith.constant 0 : i32
    %c0_i32_0 = arith.constant 0 : i32
    %c0_i32_1 = arith.constant 0 : i32
    return %c0_i32, %c0_i32_0 : i32, i32
  }
  func.func @transform_6(%arg0: i32) -> (i32, i32) {
    %c0_i32 = arith.constant 0 : i32
    %c0_i32_0 = arith.constant 0 : i32
    %c0_i32_1 = arith.constant 0 : i32
    return %c0_i32, %c0_i32_0 : i32, i32
  }
  func.func @transform_7(%arg0: i32) -> (i32, i32) {
    %c0_i32 = arith.constant 0 : i32
    %c0_i32_0 = arith.constant 0 : i32
    return %arg0, %c0_i32 : i32, i32
  }
}

</mosaic_0001>

<llo_original>
// kernel: cnn_forward.1
$region0: #{cnn_forward.1}
  #allocation0 [shape = 'u32[]', space=smem, size = 0x4, offset = 0x4, fixed_abs, tag = 'smem constant byte address 0x4 - core index']
  #allocation1 [shape = 'u32[144,128]{1,0:T(1,128)}', space=vmem, size = 0x12000, scoped, tag = 'internal scratch']
  #allocation2 [shape = 'f32[32,32]{1,0:T(8,128)}', space=vmem, size = 0x4000, scoped, tag = 'scratch operand']
  #allocation3 [shape = 'f32[16,64]{1,0:T(8,128)}', space=vmem, size = 0x2000, scoped, tag = 'scratch operand']
  %s0 = inlined_call_operand.vmem [shape: f32[32,4], index: 0, kind: input, shape index: {}]
  %s1 = inlined_call_operand.vmem [shape: f32[12,32], index: 1, kind: input, shape index: {}]
  %s2 = inlined_call_operand.vmem [shape: f32[1,32], index: 2, kind: input, shape index: {}]
  %s3 = inlined_call_operand.vmem [shape: f32[96,64], index: 3, kind: input, shape index: {}]
  %s4 = inlined_call_operand.vmem [shape: f32[1,64], index: 4, kind: input, shape index: {}]
  %s5 = inlined_call_operand.vmem [shape: f32[128,128], index: 5, kind: input, shape index: {}]
  %s6 = inlined_call_operand.vmem [shape: f32[1,128], index: 6, kind: input, shape index: {}]
  %s7 = inlined_call_operand.hbm [shape: f32[2,128], index: 7, kind: output, shape index: {}]
  %s8 = sld [smem:[#allocation0]]
  $region38: #{cnn_forward.1} parent=0
    _
  %s10 = ssub.s32 1, %s8
  %s11 = scalar_select 0, %s10, %s8
  $region1: #{cnn_forward.1} parent=0
    #allocation4 [shape = 'u8[1024]{0}', space=vmem, size = 0x400, scoped, tag = 'output window, operand 0, single buffered']
    #allocation5 [shape = 's32[1]{0}', space=sflag, size = 0x4, scoped, tag = 'scoped memory for cnn_forward.1']
    %12 = vsyncpa [#allocation5], 0
    // Predicated region
    $region2: #{cnn_forward.1} parent=1 // pred_check
      _
    $region3: #{cnn_forward.1} parent=1 // pred_check_branch
      %14 = sbr.rel (0) target = $region5
    $region4: #{cnn_forward.1} parent=1 // pred_region
      _
    $region5: #{cnn_forward.1} parent=1 // pred_fallthru
      _
    // Predicated region
    $region6: #{cnn_forward.1} parent=1 // pred_check
      _
    $region7: #{cnn_forward.1} parent=1 // pred_check_branch
      %16 = sbr.rel (0) target = $region9
    $region8: #{cnn_forward.1} parent=1 // pred_region
      _
    $region9: #{cnn_forward.1} parent=1 // pred_fallthru
      _
    // Predicated region
    $region10: #{cnn_forward.1} parent=1 // pred_check
      _
    $region11: #{cnn_forward.1} parent=1 // pred_check_branch
      %18 = sbr.rel (0) target = $region13
    $region12: #{cnn_forward.1} parent=1 // pred_region
      _
    $region13: #{cnn_forward.1} parent=1 // pred_fallthru
      _
    // Predicated region
    $region14: #{cnn_forward.1} parent=1 // pred_check
      _
    $region15: #{cnn_forward.1} parent=1 // pred_check_branch
      %20 = sbr.rel (0) target = $region17
    $region16: #{cnn_forward.1} parent=1 // pred_region
      _
    $region17: #{cnn_forward.1} parent=1 // pred_fallthru
      _
    // Predicated region
    $region18: #{cnn_forward.1} parent=1 // pred_check
      _
    $region19: #{cnn_forward.1} parent=1 // pred_check_branch
      %22 = sbr.rel (0) target = $region21
    $region20: #{cnn_forward.1} parent=1 // pred_region
      _
    $region21: #{cnn_forward.1} parent=1 // pred_fallthru
      _
    // Predicated region
    $region22: #{cnn_forward.1} parent=1 // pred_check
      _
    $region23: #{cnn_forward.1} parent=1 // pred_check_branch
      %24 = sbr.rel (0) target = $region25
    $region24: #{cnn_forward.1} parent=1 // pred_region
      _
    $region25: #{cnn_forward.1} parent=1 // pred_fallthru
      _
    // Predicated region
    $region26: #{cnn_forward.1} parent=1 // pred_check
      _
    $region27: #{cnn_forward.1} parent=1 // pred_check_branch
      %26 = sbr.rel (0) target = $region29
    $region28: #{cnn_forward.1} parent=1 // pred_region
      _
    $region29: #{cnn_forward.1} parent=1 // pred_fallthru
      _
    %v27 = vld [vmem:[%s1] sm:$0xff]
    %v28 = vld [vmem:[%s1 + $0x8] sm:$0xf]
    %v29 = vld [vmem:[%s2] sm:$0x1]
    %v30 = vld [vmem:[%s3] sm:$0xff]
    %v31 = vld [vmem:[%s3 + $0x8] sm:$0xff]
    %v32 = vld [vmem:[%s3 + $0x10] sm:$0xff]
    %v33 = vld [vmem:[%s3 + $0x18] sm:$0xff]
    %v34 = vld [vmem:[%s3 + $0x20] sm:$0xff]
    %v35 = vld [vmem:[%s3 + $0x28] sm:$0xff]
    %v36 = vld [vmem:[%s3 + $0x30] sm:$0xff]
    %v37 = vld [vmem:[%s3 + $0x38] sm:$0xff]
    %v38 = vld [vmem:[%s3 + $0x40] sm:$0xff]
    %v39 = vld [vmem:[%s3 + $0x48] sm:$0xff]
    %v40 = vld [vmem:[%s3 + $0x50] sm:$0xff]
    %v41 = vld [vmem:[%s3 + $0x58] sm:$0xff]
    %v42 = vld [vmem:[%s4] sm:$0x1]
    %v43 = vld [vmem:[%s5] sm:$0xff]
    %v44 = vld [vmem:[%s5 + $0x8] sm:$0xff]
    %v45 = vld [vmem:[%s5 + $0x10] sm:$0xff]
    %v46 = vld [vmem:[%s5 + $0x18] sm:$0xff]
    %v47 = vld [vmem:[%s5 + $0x20] sm:$0xff]
    %v48 = vld [vmem:[%s5 + $0x28] sm:$0xff]
    %v49 = vld [vmem:[%s5 + $0x30] sm:$0xff]
    %v50 = vld [vmem:[%s5 + $0x38] sm:$0xff]
    %v51 = vld [vmem:[%s5 + $0x40] sm:$0xff]
    %v52 = vld [vmem:[%s5 + $0x48] sm:$0xff]
    %v53 = vld [vmem:[%s5 + $0x50] sm:$0xff]
    %v54 = vld [vmem:[%s5 + $0x58] sm:$0xff]
    %v55 = vld [vmem:[%s5 + $0x60] sm:$0xff]
    %v56 = vld [vmem:[%s5 + $0x68] sm:$0xff]
    %v57 = vld [vmem:[%s5 + $0x70] sm:$0xff]
    %v58 = vld [vmem:[%s5 + $0x78] sm:$0xff]
    %v59 = vld [vmem:[%s6] sm:$0x1]
    %v60 = vld [vmem:[%s0] sm:$0xff]
    %v61 = vld [vmem:[%s0 + $0x8] sm:$0xff]
    %v62 = vld [vmem:[%s0 + $0x10] sm:$0xff]
    %v63 = vld [vmem:[%s0 + $0x18] sm:$0xff]
    %vm68 = vcmask 1046528
    %v69 = vrot.slane %v60, 1
    %v70 = vrot.slane %v61, 1
    %v71 = vsel %vm68, %v69, %v70
    %v72 = vrot.slane %v62, 1
    %v73 = vsel %vm68, %v70, %v72
    %v74 = vrot.slane %v63, 1
    %v75 = vsel %vm68, %v72, %v74
    %76 = vrot.lane.b32.xlu0 %v71, 4
    %v77 = vpop.permute.xlu0 %76
    %78 = vrot.lane.b32.xlu0 %v73, 4
    %v79 = vpop.permute.xlu0 %78
    %80 = vrot.lane.b32.xlu0 %v75, 4
    %v81 = vpop.permute.xlu0 %80
    %82 = vrot.lane.b32.xlu0 %v74, 4
    %v83 = vpop.permute.xlu0 %82
    %vm88 = vcmask 1045504
    %v89 = vrot.slane %v60, 2
    %v90 = vrot.slane %v61, 2
    %v91 = vsel %vm88, %v89, %v90
    %v92 = vrot.slane %v62, 2
    %v93 = vsel %vm88, %v90, %v92
    %v94 = vrot.slane %v63, 2
    %v95 = vsel %vm88, %v92, %v94
    %96 = vrot.lane.b32.xlu0 %v91, 8
    %v97 = vpop.permute.xlu0 %96
    %98 = vrot.lane.b32.xlu0 %v93, 8
    %v99 = vpop.permute.xlu0 %98
    %100 = vrot.lane.b32.xlu0 %v95, 8
    %v101 = vpop.permute.xlu0 %100
    %102 = vrot.lane.b32.xlu0 %v94, 8
    %v103 = vpop.permute.xlu0 %102
    %vm108 = vcmask 31744
    %v109 = vsel %vm108, %v60, %v77
    %v110 = vsel %vm108, %v61, %v79
    %v111 = vsel %vm108, %v62, %v81
    %v112 = vsel %vm108, %v63, %v83
    %vm113 = vcmask 64512
    %v114 = vsel %vm113, %v109, %v97
    %v115 = vsel %vm113, %v110, %v99
    %v116 = vsel %vm113, %v111, %v101
    %v117 = vsel %vm113, %v112, %v103
    %v119 = vlaneseq
    %v120 = vshrl.u32 %v119, 7
    %v121 = vsub.s32 0, %v120
    %v122 = vrot.slane %v29, %v121
    %vm124 = vcmask 97280
    %v126 = vsel %vm124, %v114, 0
    %v129 = vsel %vm124, %v115, 0
    %v132 = vsel %vm124, %v116, 0
    %v135 = vsel %vm124, %v117, 0
    %vm137 = vcmask 1043456
    %v139 = vsel %vm137, %v28, 0
    %141 = vmatprep.subr.mxu0 0.0
    %142 = vmatpush1.msra.mxu0 %v27
    %143 = vmatprep.subr.mxu0 0.0
    %144 = vmatpush1.msra.mxu0 %v139
    %145 = vmatprep.subr.mxu0 0.0
    %146 = vmatpush1.msra.mxu0 0.0
    %147 = vmatprep.subr.mxu0 0.0
    %148 = vmatpush1.msra.mxu0 0.0
    %149 = vmatprep.subr.mxu0 0.0
    %150 = vmatpush1.msra.mxu0 0.0
    %151 = vmatprep.subr.mxu0 0.0
    %152 = vmatpush1.msra.mxu0 0.0
    %153 = vmatprep.subr.mxu0 0.0
    %154 = vmatpush1.msra.mxu0 0.0
    %155 = vmatprep.subr.mxu0 0.0
    %156 = vmatpush1.msra.mxu0 0.0
    %157 = vmatprep.subr.mxu0 0.0
    %158 = vmatpush1.msra.mxu0 0.0
    %159 = vmatprep.subr.mxu0 0.0
    %160 = vmatpush1.msra.mxu0 0.0
    %161 = vmatprep.subr.mxu0 0.0
    %162 = vmatpush1.msra.mxu0 0.0
    %163 = vmatprep.subr.mxu0 0.0
    %164 = vmatpush1.msra.mxu0 0.0
    %165 = vmatprep.subr.mxu0 0.0
    %166 = vmatpush1.msra.mxu0 0.0
    %167 = vmatprep.subr.mxu0 0.0
    %168 = vmatpush1.msra.mxu0 0.0
    %169 = vmatprep.subr.mxu0 0.0
    %170 = vmatpush1.msra.mxu0 0.0
    %171 = vmatprep.subr.mxu0 0.0
    %172 = vmatpush1.msra.mxu0 0.0
    %173 = vmatprep.subr.mxu0 0.0
    %174 = vmatpush1.msra.mxu0 0.0
    %175 = vmatprep.subr.mxu0 0.0
    %176 = vmatpush1.msra.mxu0 0.0
    %177 = vmatprep.subr.mxu0 0.0
    %178 = vmatpush1.msra.mxu0 0.0
    %179 = vmatprep.subr.mxu0 0.0
    %180 = vmatpush1.msra.mxu0 0.0
    %181 = vmatprep.subr.mxu0 0.0
    %182 = vmatpush1.msra.mxu0 0.0
    %183 = vmatprep.subr.mxu0 0.0
    %184 = vmatpush1.msra.mxu0 0.0
    %185 = vmatprep.subr.mxu0 0.0
    %186 = vmatpush1.msra.mxu0 0.0
    %187 = vmatprep.subr.mxu0 0.0
    %188 = vmatpush1.msra.mxu0 0.0
    %189 = vmatprep.subr.mxu0 0.0
    %190 = vmatpush1.msra.mxu0 0.0
    %191 = vmatprep.subr.mxu0 0.0
    %192 = vmatpush1.msra.mxu0 0.0
    %193 = vmatprep.subr.mxu0 0.0
    %194 = vmatpush1.msra.mxu0 0.0
    %195 = vmatprep.subr.mxu0 0.0
    %196 = vmatpush1.msra.mxu0 0.0
    %197 = vmatprep.subr.mxu0 0.0
    %198 = vmatpush1.msra.mxu0 0.0
    %199 = vmatprep.subr.mxu0 0.0
    %200 = vmatpush1.msra.mxu0 0.0
    %201 = vmatprep.subr.mxu0 0.0
    %202 = vmatpush1.msra.mxu0 0.0
    %203 = vmatprep.subr.mxu0 0.0
    %204 = vmatpush1.msra.mxu0 0.0
    %205 = vmatprep.mubr.f32.mxu0 0.0
    %206 = vmatmul.mubr.f32.gmra.mrb[0].mxu0 %v126
    %v207 = vpop.f32.mrb[0].mxu0
    %v208 = vadd.f32 %v122, %v207
    %v209 = vpop.f32.mrb[0].mxu0
    %210 = vmatprep.mubr.f32.mxu0 0.0
    %211 = vmatmul.mubr.f32.gmra.mrb[0].mxu0 %v129
    %v212 = vpop.f32.mrb[0].mxu0
    %v213 = vadd.f32 %v122, %v212
    %v214 = vpop.f32.mrb[0].mxu0
    %215 = vmatprep.mubr.f32.mxu0 0.0
    %216 = vmatmul.mubr.f32.gmra.mrb[0].mxu0 %v132
    %v217 = vpop.f32.mrb[0].mxu0
    %v218 = vadd.f32 %v122, %v217
    %v219 = vpop.f32.mrb[0].mxu0
    %220 = vmatprep.mubr.f32.mxu0 0.0
    %221 = vmatmul.mubr.f32.gmra.mrb[0].mxu0 %v135
    %v222 = vpop.f32.mrb[0].mxu0
    %v223 = vadd.f32 %v122, %v222
    %v224 = vpop.f32.mrb[0].mxu0
    %225 = vdwg.mxu0
    %v226 = vmax.f32 %v208, 0.0
    %v227 = vmax.f32 %v213, 0.0
    %v228 = vmax.f32 %v218, 0.0
    %v229 = vmax.f32 %v223, 0.0
    %vm230 = vcmask 261120
    %231 = vst.msk [vmem:[#allocation2] sm:$0xff] %vm230, %v226
    %232 = vst.msk [vmem:[#allocation2 + $0x8] sm:$0xff] %vm230, %v227
    %233 = vst.msk [vmem:[#allocation2 + $0x10] sm:$0xff] %vm230, %v228
    %vm234 = vcmask 259072
    %235 = vst.msk [vmem:[#allocation2 + $0x18] sm:$0x3f] %vm234, %v229
    %v236 = vld [vmem:[#allocation2] ss:$2 sm:$0xff]
    %s237 = scalar_lea.vmem [#allocation2], 16
    %v238 = vld [vmem:[%s237] ss:$2 sm:$0xff]
    %s239 = scalar_lea.vmem [#allocation2], 1
    %v240 = vld [vmem:[%s239] ss:$2 sm:$0xff]
    %s241 = scalar_lea.vmem [#allocation2], 17
    %v242 = vld [vmem:[%s241] ss:$2 sm:$0xff]
    %v243 = vmax.f32 %v236, %v240
    %v244 = vmax.f32 %v238, %v242
    %v247 = vrot.slane %v243, 1
    %v248 = vrot.slane %v244, 1
    %v249 = vsel %vm68, %v247, %v248
    %250 = vrot.lane.b32.xlu0 %v249, 32
    %v251 = vpop.permute.xlu0 %250
    %252 = vrot.lane.b32.xlu0 %v248, 32
    %v253 = vpop.permute.xlu0 %252
    %v256 = vrot.slane %v243, 2
    %v257 = vrot.slane %v244, 2
    %v258 = vsel %vm88, %v256, %v257
    %259 = vrot.lane.b32.xlu0 %v258, 64
    %v260 = vpop.permute.xlu0 %259
    %261 = vrot.lane.b32.xlu0 %v257, 64
    %v262 = vpop.permute.xlu0 %261
    %v265 = vsel %vm230, %v243, %v251
    %v266 = vsel %vm230, %v244, %v253
    %vm267 = vcmask 523264
    %v268 = vsel %vm267, %v265, %v260
    %v269 = vsel %vm267, %v266, %v262
    %v271 = vlaneseq
    %v272 = vshrl.u32 %v271, 7
    %v273 = vsub.s32 0, %v272
    %v274 = vrot.slane %v42, %v273
    %vm276 = vcmask 785408
    %v278 = vsel %vm276, %v268, 0
    %v281 = vsel %vm276, %v269, 0
    %283 = vmatprep.subr.mxu0 0.0
    %284 = vmatpush1.msra.mxu0 %v30
    %285 = vmatprep.subr.mxu0 0.0
    %286 = vmatpush1.msra.mxu0 %v31
    %287 = vmatprep.subr.mxu0 0.0
    %288 = vmatpush1.msra.mxu0 %v32
    %289 = vmatprep.subr.mxu0 0.0
    %290 = vmatpush1.msra.mxu0 %v33
    %291 = vmatprep.subr.mxu0 0.0
    %292 = vmatpush1.msra.mxu0 %v34
    %293 = vmatprep.subr.mxu0 0.0
    %294 = vmatpush1.msra.mxu0 %v35
    %295 = vmatprep.subr.mxu0 0.0
    %296 = vmatpush1.msra.mxu0 %v36
    %297 = vmatprep.subr.mxu0 0.0
    %298 = vmatpush1.msra.mxu0 %v37
    %299 = vmatprep.subr.mxu0 0.0
    %300 = vmatpush1.msra.mxu0 %v38
    %301 = vmatprep.subr.mxu0 0.0
    %302 = vmatpush1.msra.mxu0 %v39
    %303 = vmatprep.subr.mxu0 0.0
    %304 = vmatpush1.msra.mxu0 %v40
    %305 = vmatprep.subr.mxu0 0.0
    %306 = vmatpush1.msra.mxu0 %v41
    %307 = vmatprep.subr.mxu0 0.0
    %308 = vmatpush1.msra.mxu0 0.0
    %309 = vmatprep.subr.mxu0 0.0
    %310 = vmatpush1.msra.mxu0 0.0
    %311 = vmatprep.subr.mxu0 0.0
    %312 = vmatpush1.msra.mxu0 0.0
    %313 = vmatprep.subr.mxu0 0.0
    %314 = vmatpush1.msra.mxu0 0.0
    %315 = vmatprep.subr.mxu0 0.0
    %316 = vmatpush1.msra.mxu0 0.0
    %317 = vmatprep.subr.mxu0 0.0
    %318 = vmatpush1.msra.mxu0 0.0
    %319 = vmatprep.subr.mxu0 0.0
    %320 = vmatpush1.msra.mxu0 0.0
    %321 = vmatprep.subr.mxu0 0.0
    %322 = vmatpush1.msra.mxu0 0.0
    %323 = vmatprep.subr.mxu0 0.0
    %324 = vmatpush1.msra.mxu0 0.0
    %325 = vmatprep.subr.mxu0 0.0
    %326 = vmatpush1.msra.mxu0 0.0
    %327 = vmatprep.subr.mxu0 0.0
    %328 = vmatpush1.msra.mxu0 0.0
    %329 = vmatprep.subr.mxu0 0.0
    %330 = vmatpush1.msra.mxu0 0.0
    %331 = vmatprep.subr.mxu0 0.0
    %332 = vmatpush1.msra.mxu0 0.0
    %333 = vmatprep.subr.mxu0 0.0
    %334 = vmatpush1.msra.mxu0 0.0
    %335 = vmatprep.subr.mxu0 0.0
    %336 = vmatpush1.msra.mxu0 0.0
    %337 = vmatprep.subr.mxu0 0.0
    %338 = vmatpush1.msra.mxu0 0.0
    %339 = vmatprep.subr.mxu0 0.0
    %340 = vmatpush1.msra.mxu0 0.0
    %341 = vmatprep.subr.mxu0 0.0
    %342 = vmatpush1.msra.mxu0 0.0
    %343 = vmatprep.subr.mxu0 0.0
    %344 = vmatpush1.msra.mxu0 0.0
    %345 = vmatprep.subr.mxu0 0.0
    %346 = vmatpush1.msra.mxu0 0.0
    %347 = vmatprep.mubr.f32.mxu0 0.0
    %348 = vmatmul.mubr.f32.gmra.mrb[0].mxu0 %v278
    %v349 = vpop.f32.mrb[0].mxu0
    %v350 = vadd.f32 %v274, %v349
    %v351 = vpop.f32.mrb[0].mxu0
    %352 = vmatprep.mubr.f32.mxu0 0.0
    %353 = vmatmul.mubr.f32.gmra.mrb[0].mxu0 %v281
    %v354 = vpop.f32.mrb[0].mxu0
    %v355 = vadd.f32 %v274, %v354
    %v356 = vpop.f32.mrb[0].mxu0
    %357 = vdwg.mxu0
    %v358 = vmax.f32 %v350, 0.0
    %v359 = vmax.f32 %v355, 0.0
    %360 = vst.msk [vmem:[#allocation3] sm:$0xff] %vm267, %v358
    %vm361 = vcmask 521216
    %362 = vst.msk [vmem:[#allocation3 + $0x8] sm:$0x3f] %vm361, %v359
    %v363 = vld [vmem:[#allocation3] ss:$8 sm:$0x3]
    %s364 = scalar_lea.vmem [#allocation3], 1
    %v365 = vld [vmem:[%s364] ss:$8 sm:$0x3]
    %v366 = vmax.f32 %v363, %v365
    %s367 = scalar_lea.vmem [#allocation3], 2
    %v368 = vld [vmem:[%s367] ss:$8 sm:$0x3]
    %s369 = scalar_lea.vmem [#allocation3], 3
    %v370 = vld [vmem:[%s369] ss:$8 sm:$0x3]
    %v371 = vmax.f32 %v368, %v370
    %373 = vrot.lane.b32.xlu0 %v371, 64
    %v374 = vpop.permute.xlu0 %373
    %v376 = vsel %vm267, %v366, %v374
    %v378 = vlaneseq
    %v379 = vshrl.u32 %v378, 7
    %v380 = vsub.s32 0, %v379
    %v381 = vrot.slane %v59, %v380
    %383 = vmatprep.subr.mxu0 0.0
    %384 = vmatpush1.msra.mxu0 %v43
    %385 = vmatprep.subr.mxu0 0.0
    %386 = vmatpush1.msra.mxu0 %v44
    %387 = vmatprep.subr.mxu0 0.0
    %388 = vmatpush1.msra.mxu0 %v45
    %389 = vmatprep.subr.mxu0 0.0
    %390 = vmatpush1.msra.mxu0 %v46
    %391 = vmatprep.subr.mxu0 0.0
    %392 = vmatpush1.msra.mxu0 %v47
    %393 = vmatprep.subr.mxu0 0.0
    %394 = vmatpush1.msra.mxu0 %v48
    %395 = vmatprep.subr.mxu0 0.0
    %396 = vmatpush1.msra.mxu0 %v49
    %397 = vmatprep.subr.mxu0 0.0
    %398 = vmatpush1.msra.mxu0 %v50
    %399 = vmatprep.subr.mxu0 0.0
    %400 = vmatpush1.msra.mxu0 %v51
    %401 = vmatprep.subr.mxu0 0.0
    %402 = vmatpush1.msra.mxu0 %v52
    %403 = vmatprep.subr.mxu0 0.0
    %404 = vmatpush1.msra.mxu0 %v53
    %405 = vmatprep.subr.mxu0 0.0
    %406 = vmatpush1.msra.mxu0 %v54
    %407 = vmatprep.subr.mxu0 0.0
    %408 = vmatpush1.msra.mxu0 %v55
    %409 = vmatprep.subr.mxu0 0.0
    %410 = vmatpush1.msra.mxu0 %v56
    %411 = vmatprep.subr.mxu0 0.0
    %412 = vmatpush1.msra.mxu0 %v57
    %413 = vmatprep.subr.mxu0 0.0
    %414 = vmatpush1.msra.mxu0 %v58
    %415 = vmatprep.subr.mxu0 0.0
    %416 = vmatpush1.msra.mxu0 0.0
    %417 = vmatprep.subr.mxu0 0.0
    %418 = vmatpush1.msra.mxu0 0.0
    %419 = vmatprep.subr.mxu0 0.0
    %420 = vmatpush1.msra.mxu0 0.0
    %421 = vmatprep.subr.mxu0 0.0
    %422 = vmatpush1.msra.mxu0 0.0
    %423 = vmatprep.subr.mxu0 0.0
    %424 = vmatpush1.msra.mxu0 0.0
    %425 = vmatprep.subr.mxu0 0.0
    %426 = vmatpush1.msra.mxu0 0.0
    %427 = vmatprep.subr.mxu0 0.0
    %428 = vmatpush1.msra.mxu0 0.0
    %429 = vmatprep.subr.mxu0 0.0
    %430 = vmatpush1.msra.mxu0 0.0
    %431 = vmatprep.subr.mxu0 0.0
    %432 = vmatpush1.msra.mxu0 0.0
    %433 = vmatprep.subr.mxu0 0.0
    %434 = vmatpush1.msra.mxu0 0.0
    %435 = vmatprep.subr.mxu0 0.0
    %436 = vmatpush1.msra.mxu0 0.0
    %437 = vmatprep.subr.mxu0 0.0
    %438 = vmatpush1.msra.mxu0 0.0
    %439 = vmatprep.subr.mxu0 0.0
    %440 = vmatpush1.msra.mxu0 0.0
    %441 = vmatprep.subr.mxu0 0.0
    %442 = vmatpush1.msra.mxu0 0.0
    %443 = vmatprep.subr.mxu0 0.0
    %444 = vmatpush1.msra.mxu0 0.0
    %445 = vmatprep.subr.mxu0 0.0
    %446 = vmatpush1.msra.mxu0 0.0
    %447 = vmatprep.mubr.f32.mxu0 0.0
    %448 = vmatmul.mubr.f32.gmra.mrb[0].mxu0 %v376
    %v449 = vpop.f32.mrb[0].mxu0
    %v450 = vadd.f32 %v381, %v449
    %v451 = vpop.f32.mrb[0].mxu0
    %452 = vdwg.mxu0
    %v453 = vmax.f32 %v450, 0.0
    %454 = vst [vmem:[#allocation4] sm:$0x3] %v453
    // Predicated region
    $region30: #{cnn_forward.1} parent=1 // pred_check
      _
    $region31: #{cnn_forward.1} parent=1 // pred_check_branch
      %456 = sbr.rel (0) target = $region33
    $region32: #{cnn_forward.1} parent=1 // pred_region
      %s458 = ssub.s32 32, 32
      %459 = vsyncadd [#allocation5], %s458
      %s461 = sshll.u32 [#allocation4], 4
      %s462 = int_to_ptr.vmem [resolvable:$true] %s461
      %464 = dma.vmem_to_hbm [thread:$0]  %s462, 32, %s7, [#allocation5]
    $region33: #{cnn_forward.1} parent=1 // pred_fallthru
      _
    // Predicated region
    $region34: #{cnn_forward.1} parent=1 // pred_check
      _
    $region35: #{cnn_forward.1} parent=1 // pred_check_branch
      %466 = sbr.rel (0) target = $region37
    $region36: #{cnn_forward.1} parent=1 // pred_region
      %467 = dma.done [#allocation5], 32
    $region37: #{cnn_forward.1} parent=1 // pred_fallthru
      _
    %468 = vsyncpa [#allocation5], 1

</llo_original>
